<compile_context>
chip_gen: v6e
topology: v6e:2x2x1
jax: 0.10.0
libtpu: 0.0.40
codegen_flags: <defaults>
</compile_context>

<pallas_src>
import functools

import jax
import jax.numpy as jnp
from jax.experimental import pallas as pl
from jax.experimental.pallas import tpu as pltpu

_EPS = 1e-6  # PyTorch PairwiseDistance default eps (added to the difference)


def _contrastive_loss_kernel(a_ref, p_ref, n_ref, out_ref, acc_ref, *,
                             margin, n_rows, d, k, needs_mask):
    """Processes one (TB, k*d) tile of row-packed embeddings; accumulates the loss sum."""
    i = pl.program_id(0)
    tbp, dp = a_ref.shape          # packed rows per tile, packed feature width (= k*d)
    n_elems = n_rows * d           # number of valid (un-padded) elements overall

    @pl.when(i == 0)
    def _init():
        acc_ref[...] = jnp.zeros_like(acc_ref)

    # Upcast to f32 only inside the kernel (keeps HBM traffic in the native dtype;
    # also required on v5e, whose VPU/EUP have no bf16 arithmetic).
    a = a_ref[...].astype(jnp.float32)
    p = p_ref[...].astype(jnp.float32)
    n = n_ref[...].astype(jnp.float32)

    dpos = a - p + _EPS            # eps added to the difference (PairwiseDistance semantics)
    dneg = a - n + _EPS
    dpos2 = dpos * dpos
    dneg2 = dneg * dneg

    lane = jax.lax.broadcasted_iota(jnp.int32, (tbp, dp), 1)
    if needs_mask:
        row = jax.lax.broadcasted_iota(jnp.int32, (tbp, dp), 0)
        flat = (i * tbp + row) * dp + lane     # flat element index in the padded layout
        dpos2 = jnp.where(flat < n_elems, dpos2, 0.0)

    # Positive term: sum_b pos_d**2 == sum of all (masked) squared diffs -> no sqrt needed.
    total = jnp.sum(dpos2, keepdims=True)      # (1, 1)

    # Negative term: per-original-row distance needed for the sqrt / hinge nonlinearity.
    if needs_mask:
        r1 = jax.lax.broadcasted_iota(jnp.int32, (tbp, 1), 0)
        row_start = (i * tbp + r1) * dp        # flat index of each packed-row start
    for j in range(k):                         # static unroll; k == 1 when d >= 128
        if k == 1:
            seg = dneg2
        else:
            in_group = (lane >= j * d) & (lane < (j + 1) * d)
            seg = jnp.where(in_group, dneg2, 0.0)
        neg_sq = jnp.sum(seg, axis=-1, keepdims=True)          # (tbp, 1) per-row ||.||^2
        hinge = jnp.maximum(margin - jnp.sqrt(neg_sq), 0.0)
        h2 = hinge * hinge
        if needs_mask:
            h2 = jnp.where(row_start + j * d < n_elems, h2, 0.0)
        total = total + jnp.sum(h2, keepdims=True)

    acc_ref[...] += total

    @pl.when(i == pl.num_programs(0) - 1)
    def _finalize():
        out_ref[...] = acc_ref[...] * (1.0 / n_rows)   # mean over the true batch size


def _pick_tile_rows(b_packed, dp, itemsize):
    # ~2 MiB per input block: 3 inputs x 2 pipeline buffers ≈ 12 MiB of VMEM, well under
    # the 32 MiB scoped default on every generation (v7x included), and >=512 rows for
    # dp<=1024 f32, which is enough to amortize per-step overhead near the HBM roofline.
    target_bytes = 2 * 1024 * 1024
    tbp = target_bytes // max(1, dp * itemsize)
    tbp = max(8, min(2048, (tbp // 8) * 8))
    # never tile wider than the (8-row aligned) packed batch
    tbp = min(tbp, ((b_packed + 7) // 8) * 8)
    return int(tbp)


def contrastive_loss(anchor, positive, negative, negative_labels=None,
                     margin=1.0, tile_rows=None):
    """Pallas TPU ContrastiveLoss forward. Returns a scalar float32 loss."""
    del negative_labels  # unused by the reference forward pass
    assert anchor.shape == positive.shape == negative.shape
    assert anchor.ndim == 2
    b, d = anchor.shape

    # Lane-dense packing factor: fold k consecutive rows into one 128-lane packed row.
    k = 128 // d if (d < 128 and 128 % d == 0) else 1
    dp = k * d

    itemsize = jnp.dtype(anchor.dtype).itemsize
    b_packed = (b + k - 1) // k
    tbp = int(tile_rows) if tile_rows is not None else _pick_tile_rows(b_packed, dp, itemsize)
    num_tiles = (b_packed + tbp - 1) // tbp
    b_packed_pad = num_tiles * tbp
    b_pad = b_packed_pad * k

    def pack(x):
        if b_pad != b:
            x = jnp.pad(x, ((0, b_pad - b), (0, 0)))   # zero rows; masked out in-kernel
        return x.reshape(b_packed_pad, dp)             # row-major: pure relabel of bytes

    kernel = functools.partial(
        _contrastive_loss_kernel,
        margin=float(margin), n_rows=int(b), d=int(d), k=int(k),
        needs_mask=(b_pad != b))

    out = pl.pallas_call(
        kernel,
        out_shape=jax.ShapeDtypeStruct((1, 1), jnp.float32),
        grid_spec=pltpu.PrefetchScalarGridSpec(
            num_scalar_prefetch=0,
            grid=(num_tiles,),
            in_specs=[pl.BlockSpec((tbp, dp), lambda i: (i, 0))] * 3,
            out_specs=pl.BlockSpec((1, 1), lambda i: (0, 0)),
            scratch_shapes=[pltpu.VMEM((1, 1), jnp.float32)],
        ),
        compiler_params=pltpu.CompilerParams(
            dimension_semantics=("arbitrary",)),   # accumulator lives across this axis
    )(pack(anchor), pack(positive), pack(negative))
    return out[0, 0]


def _reference_loss(anchor, positive, negative, margin=1.0):
    a = anchor.astype(jnp.float32)
    p = positive.astype(jnp.float32)
    n = negative.astype(jnp.float32)
    pos_d = jnp.sqrt(jnp.sum((a - p + _EPS) ** 2, axis=-1))
    neg_d = jnp.sqrt(jnp.sum((a - n + _EPS) ** 2, axis=-1))
    return jnp.mean(pos_d ** 2 + jnp.maximum(margin - neg_d, 0.0) ** 2)


if __name__ == "__main__":
    key = jax.random.PRNGKey(0)
    k_a, k_p, k_n = jax.random.split(key, 3)

    # Case 1: small hidden dim (lane-packed path, k=4), ragged batch, small forced tile
    # so the multi-tile accumulator + padding-mask path is exercised (grid=(2,)).
    B, D = 50, 32
    anchor = jax.random.normal(k_a, (B, D), dtype=jnp.float32)
    positive = jax.random.normal(k_p, (B, D), dtype=jnp.float32)
    negative = jax.random.normal(k_n, (B, D), dtype=jnp.float32)
    negative_labels = jnp.zeros((B,), dtype=jnp.int32)  # unused by the forward

    loss = contrastive_loss(anchor, positive, negative, negative_labels,
                            margin=1.0, tile_rows=8)
    loss = jax.block_until_ready(loss)
    ref = jax.block_until_ready(_reference_loss(anchor, positive, negative, margin=1.0))
    assert jnp.allclose(loss, ref, rtol=1e-4, atol=1e-4), (loss, ref)

    # Case 2: bf16 inputs (native dtype kept across the DMA), D multiple of 128 (k=1 path),
    # default heuristic tiling (single tile, no padding mask).
    B2, D2 = 24, 256
    a2 = jax.random.normal(k_a, (B2, D2), dtype=jnp.float32).astype(jnp.bfloat16)
    p2 = jax.random.normal(k_p, (B2, D2), dtype=jnp.float32).astype(jnp.bfloat16)
    n2 = jax.random.normal(k_n, (B2, D2), dtype=jnp.float32).astype(jnp.bfloat16)
    loss2 = jax.block_until_ready(contrastive_loss(a2, p2, n2, margin=0.75))
    ref2 = jax.block_until_ready(_reference_loss(a2, p2, n2, margin=0.75))
    assert jnp.allclose(loss2, ref2, rtol=1e-4, atol=1e-4), (loss2, ref2)

    print("KERNEL_OK")
</pallas_src>

<mosaic_0001>
module attributes {stable_mosaic.version = 11 : i64} {
  func.func @_contrastive_loss_kernel(%arg0: i32, %arg1: memref<8x128xf32, #tpu.memory_space<vmem>>, %arg2: memref<8x128xf32, #tpu.memory_space<vmem>>, %arg3: memref<8x128xf32, #tpu.memory_space<vmem>>, %arg4: memref<1x1xf32, #tpu.memory_space<vmem>>, %arg5: memref<1x1xf32, #tpu.memory_space<vmem>>) attributes {dimension_semantics = [#tpu.dimension_semantics<arbitrary>], iteration_bounds = array<i64: 2>, scalar_prefetch = 0 : i64, scratch_operands = 1 : i64, tpu.core_type = #tpu.core_type<tc>, window_params = [{transform_indices = @transform_0, window_bounds = array<i64: 8, 128>}, {transform_indices = @transform_1, window_bounds = array<i64: 8, 128>}, {transform_indices = @transform_2, window_bounds = array<i64: 8, 128>}, {pipeline_mode = #tpu.pipeline_mode<synchronous>, transform_indices = @transform_3, window_bounds = array<i64: 1, 1>}]} {
    %c0_i32 = arith.constant 0 : i32
    %0 = arith.cmpi eq, %arg0, %c0_i32 : i32
    %1 = arith.extui %0 : i1 to i32
    %c0_i32_0 = arith.constant 0 : i32
    %2 = arith.cmpi ne, %1, %c0_i32_0 : i32
    scf.if %2 {
      %cst_53 = arith.constant 0.000000e+00 : f32
      %151 = vector.broadcast %cst_53 : f32 to vector<1x1xf32>
      %c0_54 = arith.constant 0 : index
      %c0_55 = arith.constant 0 : index
      %152 = vector.load %arg5[%c0_54, %c0_55] : memref<1x1xf32, #tpu.memory_space<vmem>>, vector<1x1xf32>
      tpu.vector_store %arg5[%c0_54, %c0_55], %151 {strides = array<i32>} : memref<1x1xf32, #tpu.memory_space<vmem>>, vector<1x1xf32>,
    } else {
    }
    %c0 = arith.constant 0 : index
    %c0_1 = arith.constant 0 : index
    %3 = vector.load %arg1[%c0, %c0_1] : memref<8x128xf32, #tpu.memory_space<vmem>>, vector<8x128xf32>
    %c0_2 = arith.constant 0 : index
    %c0_3 = arith.constant 0 : index
    %4 = vector.load %arg2[%c0_2, %c0_3] : memref<8x128xf32, #tpu.memory_space<vmem>>, vector<8x128xf32>
    %c0_4 = arith.constant 0 : index
    %c0_5 = arith.constant 0 : index
    %5 = vector.load %arg3[%c0_4, %c0_5] : memref<8x128xf32, #tpu.memory_space<vmem>>, vector<8x128xf32>
    %6 = arith.subf %3, %4 : vector<8x128xf32>
    %cst = arith.constant 9.99999997E-7 : f32
    %7 = vector.broadcast %cst : f32 to vector<8x128xf32>
    %8 = arith.addf %6, %7 : vector<8x128xf32>
    %9 = arith.subf %3, %5 : vector<8x128xf32>
    %cst_6 = arith.constant 9.99999997E-7 : f32
    %10 = vector.broadcast %cst_6 : f32 to vector<8x128xf32>
    %11 = arith.addf %9, %10 : vector<8x128xf32>
    %12 = arith.mulf %8, %8 : vector<8x128xf32>
    %13 = arith.mulf %11, %11 : vector<8x128xf32>
    %14 = tpu.iota {dimensions = array<i32: 1>} : vector<8x128xi32>
    %15 = tpu.iota {dimensions = array<i32: 0>} : vector<8x128xi32>
    %c8_i32 = arith.constant 8 : i32
    %16 = arith.muli %arg0, %c8_i32 : i32
    %17 = vector.broadcast %16 : i32 to vector<8x128xi32>
    %18 = arith.addi %17, %15 : vector<8x128xi32>
    %c128_i32 = arith.constant 128 : i32
    %19 = vector.broadcast %c128_i32 : i32 to vector<8x128xi32>
    %20 = arith.muli %18, %19 : vector<8x128xi32>
    %21 = arith.addi %20, %14 : vector<8x128xi32>
    %c1600_i32 = arith.constant 1600 : i32
    %22 = vector.broadcast %c1600_i32 : i32 to vector<8x128xi32>
    %23 = arith.cmpi slt, %21, %22 : vector<8x128xi32>
    %cst_7 = arith.constant 0.000000e+00 : f32
    %24 = vector.broadcast %cst_7 : f32 to vector<8x128xf32>
    %25 = arith.select %23, %12, %24 : vector<8x128xi1>, vector<8x128xf32>
    %26 = vector.shape_cast %25 : vector<8x128xf32> to vector<1x8x128xf32>
    %cst_8 = arith.constant dense<0.000000e+00> : vector<1xf32>
    %27 = vector.multi_reduction <add>, %26, %cst_8 [1, 2] : vector<1x8x128xf32> to vector<1xf32>
    %28 = vector.shape_cast %27 : vector<1xf32> to vector<1x1x1xf32>
    %29 = vector.extract %28[0, 0, 0] : f32 from vector<1x1x1xf32>
    %30 = vector.broadcast %29 : f32 to vector<1x1xf32>
    %31 = tpu.iota {dimensions = array<i32: 0>} : vector<8x1xi32>
    %c8_i32_9 = arith.constant 8 : i32
    %32 = arith.muli %arg0, %c8_i32_9 : i32
    %33 = vector.broadcast %32 : i32 to vector<8x1xi32>
    %34 = arith.addi %33, %31 : vector<8x1xi32>
    %c128_i32_10 = arith.constant 128 : i32
    %35 = vector.broadcast %c128_i32_10 : i32 to vector<8x1xi32>
    %36 = arith.muli %34, %35 : vector<8x1xi32>
    %c0_i32_11 = arith.constant 0 : i32
    %37 = vector.broadcast %c0_i32_11 : i32 to vector<8x128xi32>
    %38 = arith.cmpi sge, %14, %37 : vector<8x128xi32>
    %c32_i32 = arith.constant 32 : i32
    %39 = vector.broadcast %c32_i32 : i32 to vector<8x128xi32>
    %40 = arith.cmpi slt, %14, %39 : vector<8x128xi32>
    %41 = arith.andi %38, %40 : vector<8x128xi1>
    %cst_12 = arith.constant 0.000000e+00 : f32
    %42 = vector.broadcast %cst_12 : f32 to vector<8x128xf32>
    %43 = arith.select %41, %13, %42 : vector<8x128xi1>, vector<8x128xf32>
    %cst_13 = arith.constant dense<0.000000e+00> : vector<8xf32>
    %44 = vector.multi_reduction <add>, %43, %cst_13 [1] : vector<8x128xf32> to vector<8xf32>
    %45 = vector.shape_cast %44 : vector<8xf32> to vector<8x1xf32>
    %46 = math.sqrt %45 : vector<8x1xf32>
    %cst_14 = arith.constant 1.000000e+00 : f32
    %47 = vector.broadcast %cst_14 : f32 to vector<8x1xf32>
    %48 = arith.subf %47, %46 : vector<8x1xf32>
    %cst_15 = arith.constant 0.000000e+00 : f32
    %49 = vector.broadcast %cst_15 : f32 to vector<8x1xf32>
    %50 = arith.maximumf %48, %49 : vector<8x1xf32>
    %51 = arith.mulf %50, %50 : vector<8x1xf32>
    %c0_i32_16 = arith.constant 0 : i32
    %52 = vector.broadcast %c0_i32_16 : i32 to vector<8x1xi32>
    %53 = arith.addi %36, %52 : vector<8x1xi32>
    %c1600_i32_17 = arith.constant 1600 : i32
    %54 = vector.broadcast %c1600_i32_17 : i32 to vector<8x1xi32>
    %55 = arith.cmpi slt, %53, %54 : vector<8x1xi32>
    %cst_18 = arith.constant 0.000000e+00 : f32
    %56 = vector.broadcast %cst_18 : f32 to vector<8x1xf32>
    %57 = arith.select %55, %51, %56 : vector<8x1xi1>, vector<8x1xf32>
    %58 = vector.shape_cast %57 : vector<8x1xf32> to vector<1x8x1xf32>
    %cst_19 = arith.constant dense<0.000000e+00> : vector<1xf32>
    %59 = vector.multi_reduction <add>, %58, %cst_19 [1, 2] : vector<1x8x1xf32> to vector<1xf32>
    %60 = vector.shape_cast %59 : vector<1xf32> to vector<1x1x1xf32>
    %61 = vector.extract %60[0, 0, 0] : f32 from vector<1x1x1xf32>
    %62 = vector.broadcast %61 : f32 to vector<1x1xf32>
    %63 = arith.addf %30, %62 : vector<1x1xf32>
    %c32_i32_20 = arith.constant 32 : i32
    %64 = vector.broadcast %c32_i32_20 : i32 to vector<8x128xi32>
    %65 = arith.cmpi sge, %14, %64 : vector<8x128xi32>
    %c64_i32 = arith.constant 64 : i32
    %66 = vector.broadcast %c64_i32 : i32 to vector<8x128xi32>
    %67 = arith.cmpi slt, %14, %66 : vector<8x128xi32>
    %68 = arith.andi %65, %67 : vector<8x128xi1>
    %cst_21 = arith.constant 0.000000e+00 : f32
    %69 = vector.broadcast %cst_21 : f32 to vector<8x128xf32>
    %70 = arith.select %68, %13, %69 : vector<8x128xi1>, vector<8x128xf32>
    %cst_22 = arith.constant dense<0.000000e+00> : vector<8xf32>
    %71 = vector.multi_reduction <add>, %70, %cst_22 [1] : vector<8x128xf32> to vector<8xf32>
    %72 = vector.shape_cast %71 : vector<8xf32> to vector<8x1xf32>
    %73 = math.sqrt %72 : vector<8x1xf32>
    %cst_23 = arith.constant 1.000000e+00 : f32
    %74 = vector.broadcast %cst_23 : f32 to vector<8x1xf32>
    %75 = arith.subf %74, %73 : vector<8x1xf32>
    %cst_24 = arith.constant 0.000000e+00 : f32
    %76 = vector.broadcast %cst_24 : f32 to vector<8x1xf32>
    %77 = arith.maximumf %75, %76 : vector<8x1xf32>
    %78 = arith.mulf %77, %77 : vector<8x1xf32>
    %c32_i32_25 = arith.constant 32 : i32
    %79 = vector.broadcast %c32_i32_25 : i32 to vector<8x1xi32>
    %80 = arith.addi %36, %79 : vector<8x1xi32>
    %c1600_i32_26 = arith.constant 1600 : i32
    %81 = vector.broadcast %c1600_i32_26 : i32 to vector<8x1xi32>
    %82 = arith.cmpi slt, %80, %81 : vector<8x1xi32>
    %cst_27 = arith.constant 0.000000e+00 : f32
    %83 = vector.broadcast %cst_27 : f32 to vector<8x1xf32>
    %84 = arith.select %82, %78, %83 : vector<8x1xi1>, vector<8x1xf32>
    %85 = vector.shape_cast %84 : vector<8x1xf32> to vector<1x8x1xf32>
    %cst_28 = arith.constant dense<0.000000e+00> : vector<1xf32>
    %86 = vector.multi_reduction <add>, %85, %cst_28 [1, 2] : vector<1x8x1xf32> to vector<1xf32>
    %87 = vector.shape_cast %86 : vector<1xf32> to vector<1x1x1xf32>
    %88 = vector.extract %87[0, 0, 0] : f32 from vector<1x1x1xf32>
    %89 = vector.broadcast %88 : f32 to vector<1x1xf32>
    %90 = arith.addf %63, %89 : vector<1x1xf32>
    %c64_i32_29 = arith.constant 64 : i32
    %91 = vector.broadcast %c64_i32_29 : i32 to vector<8x128xi32>
    %92 = arith.cmpi sge, %14, %91 : vector<8x128xi32>
    %c96_i32 = arith.constant 96 : i32
    %93 = vector.broadcast %c96_i32 : i32 to vector<8x128xi32>
    %94 = arith.cmpi slt, %14, %93 : vector<8x128xi32>
    %95 = arith.andi %92, %94 : vector<8x128xi1>
    %cst_30 = arith.constant 0.000000e+00 : f32
    %96 = vector.broadcast %cst_30 : f32 to vector<8x128xf32>
    %97 = arith.select %95, %13, %96 : vector<8x128xi1>, vector<8x128xf32>
    %cst_31 = arith.constant dense<0.000000e+00> : vector<8xf32>
    %98 = vector.multi_reduction <add>, %97, %cst_31 [1] : vector<8x128xf32> to vector<8xf32>
    %99 = vector.shape_cast %98 : vector<8xf32> to vector<8x1xf32>
    %100 = math.sqrt %99 : vector<8x1xf32>
    %cst_32 = arith.constant 1.000000e+00 : f32
    %101 = vector.broadcast %cst_32 : f32 to vector<8x1xf32>
    %102 = arith.subf %101, %100 : vector<8x1xf32>
    %cst_33 = arith.constant 0.000000e+00 : f32
    %103 = vector.broadcast %cst_33 : f32 to vector<8x1xf32>
    %104 = arith.maximumf %102, %103 : vector<8x1xf32>
    %105 = arith.mulf %104, %104 : vector<8x1xf32>
    %c64_i32_34 = arith.constant 64 : i32
    %106 = vector.broadcast %c64_i32_34 : i32 to vector<8x1xi32>
    %107 = arith.addi %36, %106 : vector<8x1xi32>
    %c1600_i32_35 = arith.constant 1600 : i32
    %108 = vector.broadcast %c1600_i32_35 : i32 to vector<8x1xi32>
    %109 = arith.cmpi slt, %107, %108 : vector<8x1xi32>
    %cst_36 = arith.constant 0.000000e+00 : f32
    %110 = vector.broadcast %cst_36 : f32 to vector<8x1xf32>
    %111 = arith.select %109, %105, %110 : vector<8x1xi1>, vector<8x1xf32>
    %112 = vector.shape_cast %111 : vector<8x1xf32> to vector<1x8x1xf32>
    %cst_37 = arith.constant dense<0.000000e+00> : vector<1xf32>
    %113 = vector.multi_reduction <add>, %112, %cst_37 [1, 2] : vector<1x8x1xf32> to vector<1xf32>
    %114 = vector.shape_cast %113 : vector<1xf32> to vector<1x1x1xf32>
    %115 = vector.extract %114[0, 0, 0] : f32 from vector<1x1x1xf32>
    %116 = vector.broadcast %115 : f32 to vector<1x1xf32>
    %117 = arith.addf %90, %116 : vector<1x1xf32>
    %c96_i32_38 = arith.constant 96 : i32
    %118 = vector.broadcast %c96_i32_38 : i32 to vector<8x128xi32>
    %119 = arith.cmpi sge, %14, %118 : vector<8x128xi32>
    %c128_i32_39 = arith.constant 128 : i32
    %120 = vector.broadcast %c128_i32_39 : i32 to vector<8x128xi32>
    %121 = arith.cmpi slt, %14, %120 : vector<8x128xi32>
    %122 = arith.andi %119, %121 : vector<8x128xi1>
    %cst_40 = arith.constant 0.000000e+00 : f32
    %123 = vector.broadcast %cst_40 : f32 to vector<8x128xf32>
    %124 = arith.select %122, %13, %123 : vector<8x128xi1>, vector<8x128xf32>
    %cst_41 = arith.constant dense<0.000000e+00> : vector<8xf32>
    %125 = vector.multi_reduction <add>, %124, %cst_41 [1] : vector<8x128xf32> to vector<8xf32>
    %126 = vector.shape_cast %125 : vector<8xf32> to vector<8x1xf32>
    %127 = math.sqrt %126 : vector<8x1xf32>
    %cst_42 = arith.constant 1.000000e+00 : f32
    %128 = vector.broadcast %cst_42 : f32 to vector<8x1xf32>
    %129 = arith.subf %128, %127 : vector<8x1xf32>
    %cst_43 = arith.constant 0.000000e+00 : f32
    %130 = vector.broadcast %cst_43 : f32 to vector<8x1xf32>
    %131 = arith.maximumf %129, %130 : vector<8x1xf32>
    %132 = arith.mulf %131, %131 : vector<8x1xf32>
    %c96_i32_44 = arith.constant 96 : i32
    %133 = vector.broadcast %c96_i32_44 : i32 to vector<8x1xi32>
    %134 = arith.addi %36, %133 : vector<8x1xi32>
    %c1600_i32_45 = arith.constant 1600 : i32
    %135 = vector.broadcast %c1600_i32_45 : i32 to vector<8x1xi32>
    %136 = arith.cmpi slt, %134, %135 : vector<8x1xi32>
    %cst_46 = arith.constant 0.000000e+00 : f32
    %137 = vector.broadcast %cst_46 : f32 to vector<8x1xf32>
    %138 = arith.select %136, %132, %137 : vector<8x1xi1>, vector<8x1xf32>
    %139 = vector.shape_cast %138 : vector<8x1xf32> to vector<1x8x1xf32>
    %cst_47 = arith.constant dense<0.000000e+00> : vector<1xf32>
    %140 = vector.multi_reduction <add>, %139, %cst_47 [1, 2] : vector<1x8x1xf32> to vector<1xf32>
    %141 = vector.shape_cast %140 : vector<1xf32> to vector<1x1x1xf32>
    %142 = vector.extract %141[0, 0, 0] : f32 from vector<1x1x1xf32>
    %143 = vector.broadcast %142 : f32 to vector<1x1xf32>
    %144 = arith.addf %117, %143 : vector<1x1xf32>
    %c0_48 = arith.constant 0 : index
    %c0_49 = arith.constant 0 : index
    %145 = vector.load %arg5[%c0_48, %c0_49] : memref<1x1xf32, #tpu.memory_space<vmem>>, vector<1x1xf32>
    %146 = arith.addf %145, %144 : vector<1x1xf32>
    %c0_50 = arith.constant 0 : index
    %c0_51 = arith.constant 0 : index
    %147 = vector.load %arg5[%c0_50, %c0_51] : memref<1x1xf32, #tpu.memory_space<vmem>>, vector<1x1xf32>
    tpu.vector_store %arg5[%c0_50, %c0_51], %146 {strides = array<i32>} : memref<1x1xf32, #tpu.memory_space<vmem>>, vector<1x1xf32>,
    %c1_i32 = arith.constant 1 : i32
    %148 = arith.cmpi eq, %arg0, %c1_i32 : i32
    %149 = arith.extui %148 : i1 to i32
    %c0_i32_52 = arith.constant 0 : i32
    %150 = arith.cmpi ne, %149, %c0_i32_52 : i32
    scf.if %150 {
      %c0_53 = arith.constant 0 : index
      %c0_54 = arith.constant 0 : index
      %151 = vector.load %arg5[%c0_53, %c0_54] : memref<1x1xf32, #tpu.memory_space<vmem>>, vector<1x1xf32>
      %cst_55 = arith.constant 2.000000e-02 : f32
      %152 = vector.broadcast %cst_55 : f32 to vector<1x1xf32>
      %153 = arith.mulf %151, %152 : vector<1x1xf32>
      %c0_56 = arith.constant 0 : index
      %c0_57 = arith.constant 0 : index
      %154 = vector.load %arg4[%c0_56, %c0_57] : memref<1x1xf32, #tpu.memory_space<vmem>>, vector<1x1xf32>
      tpu.vector_store %arg4[%c0_56, %c0_57], %153 {strides = array<i32>} : memref<1x1xf32, #tpu.memory_space<vmem>>, vector<1x1xf32>,
    } else {
    }
    return
  }
  func.func @transform_0(%arg0: i32) -> (i32, i32) {
    %c0_i32 = arith.constant 0 : i32
    %c0_i32_0 = arith.constant 0 : i32
    return %arg0, %c0_i32 : i32, i32
  }
  func.func @transform_1(%arg0: i32) -> (i32, i32) {
    %c0_i32 = arith.constant 0 : i32
    %c0_i32_0 = arith.constant 0 : i32
    return %arg0, %c0_i32 : i32, i32
  }
  func.func @transform_2(%arg0: i32) -> (i32, i32) {
    %c0_i32 = arith.constant 0 : i32
    %c0_i32_0 = arith.constant 0 : i32
    return %arg0, %c0_i32 : i32, i32
  }
  func.func @transform_3(%arg0: i32) -> (i32, i32) {
    %c0_i32 = arith.constant 0 : i32
    %c0_i32_0 = arith.constant 0 : i32
    %c0_i32_1 = arith.constant 0 : i32
    return %c0_i32, %c0_i32_0 : i32, i32
  }
}

</mosaic_0001>

<llo_original>
// kernel: tpu_custom_call.1
$region0: #{tpu_custom_call.1}
  #allocation0 [shape = 'u32[]', space=smem, size = 0x4, offset = 0x4, fixed_abs, tag = 'smem constant byte address 0x4 - core index']
  #allocation1 [shape = 'u32[144,128]{1,0:T(1,128)}', space=vmem, size = 0x12000, scoped, tag = 'internal scratch']
  #allocation2 [shape = 'f32[1,1]{1,0:T(1,128)}', space=vmem, size = 0x200, scoped, tag = 'scratch operand']
  %s0 = inlined_call_operand.hbm [shape: f32[16,128], index: 0, kind: input, shape index: {}]
  %s1 = inlined_call_operand.hbm [shape: f32[16,128], index: 1, kind: input, shape index: {}]
  %s2 = inlined_call_operand.hbm [shape: f32[16,128], index: 2, kind: input, shape index: {}]
  %s3 = inlined_call_operand.hbm [shape: f32[1,1], index: 3, kind: output, shape index: {}]
  %s4 = sld [smem:[#allocation0]]
  $region65: #{tpu_custom_call.1} parent=0
    _
  %s6 = ssub.s32 1, %s4
  %s7 = scalar_select 0, %s6, %s4
  $region1: #{tpu_custom_call.1} parent=0
    #allocation3 [shape = 'u8[8192]{0}', space=vmem, size = 0x2000, scoped, tag = 'input window, operand 0']
    #allocation4 [shape = 's32[2]{0}', space=sflag, size = 0x8, scoped, tag = 'scoped memory for tpu_custom_call.1']
    #allocation5 [shape = 's32[2]{0}', space=sflag, size = 0x8, scoped, tag = 'scoped memory for tpu_custom_call.1']
    #allocation6 [shape = 'u8[8192]{0}', space=vmem, size = 0x2000, scoped, tag = 'input window, operand 1']
    #allocation7 [shape = 's32[2]{0}', space=sflag, size = 0x8, scoped, tag = 'scoped memory for tpu_custom_call.1']
    #allocation8 [shape = 'u8[8192]{0}', space=vmem, size = 0x2000, scoped, tag = 'input window, operand 2']
    #allocation9 [shape = 'u8[512]{0}', space=vmem, size = 0x400, scoped, tag = 'output window, operand 0, single buffered']
    %8 = vsyncpa [#allocation4], 0
    %s9 = scalar_lea.sflag [#allocation4], 1
    %10 = vsyncpa %s9, 0
    %11 = vsyncpa [#allocation7], 0
    %s12 = scalar_lea.sflag [#allocation7], 1
    %13 = vsyncpa %s12, 0
    %14 = vsyncpa [#allocation5], 0
    loop: start=0, step=1, limit=4
    $region2: #{tpu_custom_call.1} parent=1 // loop_pre_header
      _
    $region3: #{tpu_custom_call.1} parent=1 // loop_header
      %s16 = sphi 0, %s20
      %p17 = scmp.ge.s32.totalorder %s16, 4
      %s26 = sphi 0, %s28
      %s29 = sphi 0, %s26
      %s30 = sphi 0, %s29
      %s46 = sphi 0, %s30
      %s52 = sphi 0, %s54
      %s55 = sphi 0, %s52
      %s56 = sphi 0, %s55
      %s72 = sphi 0, %s56
      %s78 = sphi 0, %s80
      %s81 = sphi 0, %s78
      %s82 = sphi 0, %s81
      %s98 = sphi 0, %s82
      %s102 = sphi 0, %s102
      %s104 = sphi 0, %s102
      %s105 = sphi 0, %s104
      %s119 = sphi 0, %s105
    $region4: #{tpu_custom_call.1} parent=1 // loop_header_branch
      %19 = sbr.rel (%p17) target = $region8
    $region5: #{tpu_custom_call.1} parent=1 // loop_body
      %s21 = ssub.s32 %s16, 1
      %s22 = ssub.s32 %s16, 2
      %s23 = sadd.s32 %s16, 1
      %s24 = ssub.s32 %s16, %s23
      %p25 = scmp.eq.s32.totalorder %s24, 0
      %s27 = sadd.s32 %s26, 1
      %s28 = scalar_select %p25, %s26, %s27
      %p31 = pneg %p25
      %p32 = scmp.eq.s32.totalorder %s16, 1
      %p33 = por %p31, %p32
      %p34 = scmp.ne.s32.totalorder %s26, %s29
      %p35 = scmp.eq.s32.totalorder %s16, 0
      %p36 = por %p34, %p35
      %p37 = scmp.ne.s32.totalorder %s26, %s29
      %p38 = scmp.eq.s32.totalorder %s21, 1
      %p39 = por %p37, %p38
      %p40 = scmp.ne.s32.totalorder %s29, %s30
      %p41 = scmp.eq.s32.totalorder %s21, 0
      %p42 = por %p40, %p41
      %p43 = scmp.ne.s32.totalorder %s29, %s30
      %p44 = scmp.eq.s32.totalorder %s22, 1
      %p45 = por %p43, %p44
      %p47 = scmp.ne.s32.totalorder %s30, %s46
      %p48 = scmp.eq.s32.totalorder %s22, 0
      %p49 = por %p47, %p48
      %s50 = ssub.s32 %s16, %s23
      %p51 = scmp.eq.s32.totalorder %s50, 0
      %s53 = sadd.s32 %s52, 1
      %s54 = scalar_select %p51, %s52, %s53
      %p57 = pneg %p51
      %p58 = scmp.eq.s32.totalorder %s16, 1
      %p59 = por %p57, %p58
      %p60 = scmp.ne.s32.totalorder %s52, %s55
      %p61 = scmp.eq.s32.totalorder %s16, 0
      %p62 = por %p60, %p61
      %p63 = scmp.ne.s32.totalorder %s52, %s55
      %p64 = scmp.eq.s32.totalorder %s21, 1
      %p65 = por %p63, %p64
      %p66 = scmp.ne.s32.totalorder %s55, %s56
      %p67 = scmp.eq.s32.totalorder %s21, 0
      %p68 = por %p66, %p67
      %p69 = scmp.ne.s32.totalorder %s55, %s56
      %p70 = scmp.eq.s32.totalorder %s22, 1
      %p71 = por %p69, %p70
      %p73 = scmp.ne.s32.totalorder %s56, %s72
      %p74 = scmp.eq.s32.totalorder %s22, 0
      %p75 = por %p73, %p74
      %s76 = ssub.s32 %s16, %s23
      %p77 = scmp.eq.s32.totalorder %s76, 0
      %s79 = sadd.s32 %s78, 1
      %s80 = scalar_select %p77, %s78, %s79
      %p83 = pneg %p77
      %p84 = scmp.eq.s32.totalorder %s16, 1
      %p85 = por %p83, %p84
      %p86 = scmp.ne.s32.totalorder %s78, %s81
      %p87 = scmp.eq.s32.totalorder %s16, 0
      %p88 = por %p86, %p87
      %p89 = scmp.ne.s32.totalorder %s78, %s81
      %p90 = scmp.eq.s32.totalorder %s21, 1
      %p91 = por %p89, %p90
      %p92 = scmp.ne.s32.totalorder %s81, %s82
      %p93 = scmp.eq.s32.totalorder %s21, 0
      %p94 = por %p92, %p93
      %p95 = scmp.ne.s32.totalorder %s81, %s82
      %p96 = scmp.eq.s32.totalorder %s22, 1
      %p97 = por %p95, %p96
      %p99 = scmp.ne.s32.totalorder %s82, %s98
      %p100 = scmp.eq.s32.totalorder %s22, 0
      %p101 = por %p99, %p100
      %s103 = sadd.s32 %s102, 1
      %p106 = scmp.eq.s32.totalorder %s16, 1
      %p107 = scmp.ne.s32.totalorder %s102, %s104
      %p108 = scmp.eq.s32.totalorder %s16, 0
      %p109 = por %p107, %p108
      %p110 = scmp.ne.s32.totalorder %s102, %s104
      %p111 = scmp.eq.s32.totalorder %s21, 1
      %p112 = por %p110, %p111
      %p113 = scmp.ne.s32.totalorder %s104, %s105
      %p114 = scmp.eq.s32.totalorder %s21, 0
      %p115 = por %p113, %p114
      %p116 = scmp.ne.s32.totalorder %s104, %s105
      %p117 = scmp.eq.s32.totalorder %s22, 1
      %p118 = por %p116, %p117
      %p120 = scmp.ne.s32.totalorder %s105, %s119
      %p121 = scmp.eq.s32.totalorder %s22, 0
      %p122 = por %p120, %p121
      %p123 = scmp.le.s32.totalorder 1, %s16
      %p124 = scmp.lt.s32.totalorder %s16, 3
      %p125 = pnand %p123, %p124
      %p126 = pneg %p125
      // Predicated region
      $region9: #{tpu_custom_call.1} parent=5 // pred_check
        _
      $region10: #{tpu_custom_call.1} parent=5 // pred_check_branch
        %128 = sbr.rel (%p125) target = $region12
      $region11: #{tpu_custom_call.1} parent=5 // pred_region
        %s129 = ssub.s32 %s16, 1
      $region12: #{tpu_custom_call.1} parent=5 // pred_fallthru
        _
      %p130 = scmp.lt.s32.totalorder %s16, 2
      // Predicated region
      $region13: #{tpu_custom_call.1} parent=5 // pred_check
        %p131 = pneg %p130
      $region14: #{tpu_custom_call.1} parent=5 // pred_check_branch
        %133 = sbr.rel (%p131) target = $region16
      $region15: #{tpu_custom_call.1} parent=5 // pred_region
        // Predicated region
        $region17: #{tpu_custom_call.1} parent=15 // pred_check
          %p134 = pneg %p36
        $region18: #{tpu_custom_call.1} parent=15 // pred_check_branch
          %136 = sbr.rel (%p134) target = $region20
        $region19: #{tpu_custom_call.1} parent=15 // pred_region
          %s137 = sand.u32 %s26, 1
          %s138 = scalar_lea.sflag [#allocation4], %s137
          %s139 = sand.u32 %s26, 1
          %s140 = smul.addr %s139, 8
          %s141 = scalar_lea.vmem [#allocation3], %s140
          %s143 = ssub.s32 128, 128
          %144 = vsyncadd %s138, %s143
          %s145 = smul.addr %s16, 128
          %s146 = scalar_lea.hbm %s0, %s145
          %s148 = sshll.u32 %s141, 4
          %s149 = int_to_ptr.vmem [resolvable:$true] %s148
          %151 = dma.hbm_to_vmem [thread:$0]  %s146, 128, %s149, %s138
        $region20: #{tpu_custom_call.1} parent=15 // pred_fallthru
          _
        // Predicated region
        $region21: #{tpu_custom_call.1} parent=15 // pred_check
          %p152 = pneg %p62
        $region22: #{tpu_custom_call.1} parent=15 // pred_check_branch
          %154 = sbr.rel (%p152) target = $region24
        $region23: #{tpu_custom_call.1} parent=15 // pred_region
          %s155 = sand.u32 %s16, 1
          %s156 = scalar_lea.sflag [#allocation7], %s155
          %s157 = sand.u32 %s52, 1
          %s158 = smul.addr %s157, 8
          %s159 = scalar_lea.vmem [#allocation6], %s158
          %s161 = ssub.s32 128, 128
          %162 = vsyncadd %s156, %s161
          %s163 = smul.addr %s16, 128
          %s164 = scalar_lea.hbm %s1, %s163
          %s166 = sshll.u32 %s159, 4
          %s167 = int_to_ptr.vmem [resolvable:$true] %s166
          %169 = dma.hbm_to_vmem [thread:$0]  %s164, 128, %s167, %s156
        $region24: #{tpu_custom_call.1} parent=15 // pred_fallthru
          _
        // Predicated region
        $region25: #{tpu_custom_call.1} parent=15 // pred_check
          %p170 = pneg %p88
        $region26: #{tpu_custom_call.1} parent=15 // pred_check_branch
          %172 = sbr.rel (%p170) target = $region28
        $region27: #{tpu_custom_call.1} parent=15 // pred_region
          %s173 = sand.u32 %s16, 1
          %s174 = scalar_lea.sflag [#allocation7], %s173
          %s175 = sand.u32 %s78, 1
          %s176 = smul.addr %s175, 8
          %s177 = scalar_lea.vmem [#allocation8], %s176
          %s179 = ssub.s32 128, 128
          %180 = vsyncadd %s174, %s179
          %s181 = smul.addr %s16, 128
          %s182 = scalar_lea.hbm %s2, %s181
          %s184 = sshll.u32 %s177, 4
          %s185 = int_to_ptr.vmem [resolvable:$true] %s184
          %187 = dma.hbm_to_vmem [thread:$0]  %s182, 128, %s185, %s174
        $region28: #{tpu_custom_call.1} parent=15 // pred_fallthru
          _
      $region16: #{tpu_custom_call.1} parent=5 // pred_fallthru
        _
      %p188 = scmp.le.s32.totalorder 1, %s16
      %p189 = scmp.lt.s32.totalorder %s16, 3
      %p190 = pnand %p188, %p189
      %p191 = pneg %p190
      // Predicated region
      $region29: #{tpu_custom_call.1} parent=5 // pred_check
        _
      $region30: #{tpu_custom_call.1} parent=5 // pred_check_branch
        %193 = sbr.rel (%p190) target = $region32
      $region31: #{tpu_custom_call.1} parent=5 // pred_region
        %s194 = ssub.s32 %s16, 1
        %s195 = sand.u32 %s29, 1
        %s196 = scalar_lea.sflag [#allocation4], %s195
        %s197 = sand.u32 %s29, 1
        %s198 = smul.addr %s197, 8
        %s199 = scalar_lea.vmem [#allocation3], %s198
        // Predicated region
        $region33: #{tpu_custom_call.1} parent=31 // pred_check
          %p200 = pneg %p42
        $region34: #{tpu_custom_call.1} parent=31 // pred_check_branch
          %202 = sbr.rel (%p200) target = $region36
        $region35: #{tpu_custom_call.1} parent=31 // pred_region
          %203 = dma.done %s196, 128
        $region36: #{tpu_custom_call.1} parent=31 // pred_fallthru
          _
        %s204 = sand.u32 %s21, 1
        %s205 = scalar_lea.sflag [#allocation7], %s204
        %s206 = sand.u32 %s55, 1
        %s207 = smul.addr %s206, 8
        %s208 = scalar_lea.vmem [#allocation6], %s207
        // Predicated region
        $region37: #{tpu_custom_call.1} parent=31 // pred_check
          %p209 = pneg %p68
        $region38: #{tpu_custom_call.1} parent=31 // pred_check_branch
          %211 = sbr.rel (%p209) target = $region40
        $region39: #{tpu_custom_call.1} parent=31 // pred_region
          %212 = dma.done %s205, 128
        $region40: #{tpu_custom_call.1} parent=31 // pred_fallthru
          _
        %s213 = sand.u32 %s21, 1
        %s214 = scalar_lea.sflag [#allocation7], %s213
        %s215 = sand.u32 %s81, 1
        %s216 = smul.addr %s215, 8
        %s217 = scalar_lea.vmem [#allocation8], %s216
        // Predicated region
        $region41: #{tpu_custom_call.1} parent=31 // pred_check
          %p218 = pneg %p94
        $region42: #{tpu_custom_call.1} parent=31 // pred_check_branch
          %220 = sbr.rel (%p218) target = $region44
        $region43: #{tpu_custom_call.1} parent=31 // pred_region
          %221 = dma.done %s214, 128
        $region44: #{tpu_custom_call.1} parent=31 // pred_fallthru
          _
        %s222 = sand.u32 %s29, 1
        %s223 = scalar_lea.sflag [#allocation4], %s222
        %s224 = sand.u32 %s29, 1
        %s225 = smul.addr %s224, 8
        %s226 = scalar_lea.vmem [#allocation3], %s225
        %p227 = pneg %p42
        %p228 = pneg %p39
        %s229 = sand.u32 %s21, 1
        %s230 = scalar_lea.sflag [#allocation7], %s229
        %s231 = sand.u32 %s55, 1
        %s232 = smul.addr %s231, 8
        %s233 = scalar_lea.vmem [#allocation6], %s232
        %p234 = pneg %p68
        %p235 = pneg %p65
        %s236 = sand.u32 %s21, 1
        %s237 = scalar_lea.sflag [#allocation7], %s236
        %s238 = sand.u32 %s81, 1
        %s239 = smul.addr %s238, 8
        %s240 = scalar_lea.vmem [#allocation8], %s239
        %p241 = pneg %p94
        %p242 = pneg %p91
        %p243 = pneg %p115
        %p244 = pneg %p112
        %p245 = scmp.eq.s32.totalorder %s21, 0
        // Predicated region
        $region45: #{tpu_custom_call.1} parent=31 // pred_check
          %p246 = pneg %p245
        $region46: #{tpu_custom_call.1} parent=31 // pred_check_branch
          %248 = sbr.rel (%p246) target = $region48
        $region47: #{tpu_custom_call.1} parent=31 // pred_region
          %vm249 = vcmask 0
          %250 = vst.msk [vmem:[#allocation2] sm:$0x1] %vm249, 0.0
        $region48: #{tpu_custom_call.1} parent=31 // pred_fallthru
          _
        %v251 = vld [vmem:[%s199] sm:$0xff]
        %v252 = vld [vmem:[%s208] sm:$0xff]
        %v253 = vld [vmem:[%s217] sm:$0xff]
        %v254 = vsub.f32 %v251, %v252
        %v255 = vadd.f32 %v254, 1e-06
        %v256 = vsub.f32 %v251, %v253
        %v257 = vadd.f32 %v256, 1e-06
        %v258 = vmul.f32 %v255, %v255
        %v259 = vmul.f32 %v257, %v257
        %v260 = vlaneseq
        %v261 = vand.u32 %v260, 127
        %v262 = vlaneseq
        %v263 = vshrl.u32 %v262, 7
        %s264 = smul.u32 %s21, 8
        %v265 = vstv %s264
        %v266 = vadd.s32 %v265, %v263
        %v267 = vmul.u32 %v266, 128
        %v268 = vadd.s32 %v267, %v261
        %vm269 = vcmp.lt.s32.totalorder %v268, 1600
        %v270 = vsel %vm269, %v258, 0.0
        %271 = vadd.xlane.f32.xlu0 %v270
        %v272 = vpop.xlane.xlu0 %271
        %v273 = vrot.slane %v272, 4
        %v274 = vadd.f32 %v272, %v273
        %v275 = vrot.slane %v274, 2
        %v276 = vadd.f32 %v274, %v275
        %v277 = vrot.slane %v276, 1
        %v278 = vadd.f32 %v276, %v277
        %s279 = vtos %v278
        %v280 = vstv %s279
        %vm281 = vcmp.ge.s32.totalorder %v261, 0
        %vm282 = vcmp.lt.s32.totalorder %v261, 32
        %vm283 = vmand %vm281, %vm282
        %v284 = vsel %vm283, %v259, 0.0
        %285 = vadd.xlane.f32.xlu0 %v284
        %v286 = vpop.xlane.xlu0 %285
        %v287 = vrsqrt.pop %v286
        %v288 = vmul.f32 %v286, %v287
        %vm289 = vcmp.eq.f32.partialorder %v286, inf
        %v290 = vsel %vm289, %v286, %v288
        %vm291 = vcmp.eq.f32.partialorder %v286, 0.0
        %v292 = vand.u32 %v286, 2147483648
        %v293 = vsel %vm291, %v292, %v290
        %v294 = vsub.f32 1.0, %v293
        %v295 = vmax.f32 %v294, 0.0
        %v296 = vmul.f32 %v295, %v295
        %vm297 = vcmp.lt.s32.totalorder %v267, 1600
        %v298 = vsel %vm297, %v296, 0.0
        %vm299 = vcmask 7168
        %v300 = vsel %vm299, %v298, 0.0
        %301 = vadd.xlane.f32.xlu0 %v300
        %v302 = vpop.xlane.xlu0 %301
        %v303 = vrot.slane %v302, 4
        %v304 = vadd.f32 %v302, %v303
        %v305 = vrot.slane %v304, 2
        %v306 = vadd.f32 %v304, %v305
        %v307 = vrot.slane %v306, 1
        %v308 = vadd.f32 %v306, %v307
        %s309 = vtos %v308
        %v310 = vstv %s309
        %v311 = vadd.f32 %v280, %v310
        %vm312 = vcmp.ge.s32.totalorder %v261, 32
        %vm313 = vcmp.lt.s32.totalorder %v261, 64
        %vm314 = vmand %vm312, %vm313
        %v315 = vsel %vm314, %v259, 0.0
        %316 = vadd.xlane.f32.xlu0 %v315
        %v317 = vpop.xlane.xlu0 %316
        %v318 = vrsqrt.pop %v317
        %v319 = vmul.f32 %v317, %v318
        %vm320 = vcmp.eq.f32.partialorder %v317, inf
        %v321 = vsel %vm320, %v317, %v319
        %vm322 = vcmp.eq.f32.partialorder %v317, 0.0
        %v323 = vand.u32 %v317, 2147483648
        %v324 = vsel %vm322, %v323, %v321
        %v325 = vsub.f32 1.0, %v324
        %v326 = vmax.f32 %v325, 0.0
        %v327 = vmul.f32 %v326, %v326
        %v328 = vadd.s32 %v267, 32
        %vm329 = vcmp.lt.s32.totalorder %v328, 1600
        %v330 = vsel %vm329, %v327, 0.0
        %v331 = vsel %vm299, %v330, 0.0
        %332 = vadd.xlane.f32.xlu0 %v331
        %v333 = vpop.xlane.xlu0 %332
        %v334 = vrot.slane %v333, 4
        %v335 = vadd.f32 %v333, %v334
        %v336 = vrot.slane %v335, 2
        %v337 = vadd.f32 %v335, %v336
        %v338 = vrot.slane %v337, 1
        %v339 = vadd.f32 %v337, %v338
        %s340 = vtos %v339
        %v341 = vstv %s340
        %v342 = vadd.f32 %v311, %v341
        %vm343 = vcmp.ge.s32.totalorder %v261, 64
        %vm344 = vcmp.lt.s32.totalorder %v261, 96
        %vm345 = vmand %vm343, %vm344
        %v346 = vsel %vm345, %v259, 0.0
        %347 = vadd.xlane.f32.xlu0 %v346
        %v348 = vpop.xlane.xlu0 %347
        %v349 = vrsqrt.pop %v348
        %v350 = vmul.f32 %v348, %v349
        %vm351 = vcmp.eq.f32.partialorder %v348, inf
        %v352 = vsel %vm351, %v348, %v350
        %vm353 = vcmp.eq.f32.partialorder %v348, 0.0
        %v354 = vand.u32 %v348, 2147483648
        %v355 = vsel %vm353, %v354, %v352
        %v356 = vsub.f32 1.0, %v355
        %v357 = vmax.f32 %v356, 0.0
        %v358 = vmul.f32 %v357, %v357
        %v359 = vadd.s32 %v267, 64
        %vm360 = vcmp.lt.s32.totalorder %v359, 1600
        %v361 = vsel %vm360, %v358, 0.0
        %v362 = vsel %vm299, %v361, 0.0
        %363 = vadd.xlane.f32.xlu0 %v362
        %v364 = vpop.xlane.xlu0 %363
        %v365 = vrot.slane %v364, 4
        %v366 = vadd.f32 %v364, %v365
        %v367 = vrot.slane %v366, 2
        %v368 = vadd.f32 %v366, %v367
        %v369 = vrot.slane %v368, 1
        %v370 = vadd.f32 %v368, %v369
        %s371 = vtos %v370
        %v372 = vstv %s371
        %v373 = vadd.f32 %v342, %v372
        %vm374 = vcmp.ge.s32.totalorder %v261, 96
        %vm375 = vcmp.lt.s32.totalorder %v261, 128
        %vm376 = vmand %vm374, %vm375
        %v377 = vsel %vm376, %v259, 0.0
        %378 = vadd.xlane.f32.xlu0 %v377
        %v379 = vpop.xlane.xlu0 %378
        %v380 = vrsqrt.pop %v379
        %v381 = vmul.f32 %v379, %v380
        %vm382 = vcmp.eq.f32.partialorder %v379, inf
        %v383 = vsel %vm382, %v379, %v381
        %vm384 = vcmp.eq.f32.partialorder %v379, 0.0
        %v385 = vand.u32 %v379, 2147483648
        %v386 = vsel %vm384, %v385, %v383
        %v387 = vsub.f32 1.0, %v386
        %v388 = vmax.f32 %v387, 0.0
        %v389 = vmul.f32 %v388, %v388
        %v390 = vadd.s32 %v267, 96
        %vm391 = vcmp.lt.s32.totalorder %v390, 1600
        %v392 = vsel %vm391, %v389, 0.0
        %v393 = vsel %vm299, %v392, 0.0
        %394 = vadd.xlane.f32.xlu0 %v393
        %v395 = vpop.xlane.xlu0 %394
        %v396 = vrot.slane %v395, 4
        %v397 = vadd.f32 %v395, %v396
        %v398 = vrot.slane %v397, 2
        %v399 = vadd.f32 %v397, %v398
        %v400 = vrot.slane %v399, 1
        %v401 = vadd.f32 %v399, %v400
        %s402 = vtos %v401
        %v403 = vstv %s402
        %v404 = vadd.f32 %v373, %v403
        %v405 = vld [vmem:[#allocation2] sm:$0x1]
        %v406 = vadd.f32 %v405, %v404
        %vm407 = vcmask 0
        %408 = vst.msk [vmem:[#allocation2] sm:$0x1] %vm407, %v406
        %p409 = scmp.eq.s32.totalorder %s21, 1
        // Predicated region
        $region49: #{tpu_custom_call.1} parent=31 // pred_check
          %p410 = pneg %p409
        $region50: #{tpu_custom_call.1} parent=31 // pred_check_branch
          %412 = sbr.rel (%p410) target = $region52
        $region51: #{tpu_custom_call.1} parent=31 // pred_region
          %v413 = vld [vmem:[#allocation2] sm:$0x1]
          %v414 = vmul.f32 %v413, 0.02
          %415 = vst.msk [vmem:[#allocation9] sm:$0x1] %vm407, %v414
        $region52: #{tpu_custom_call.1} parent=31 // pred_fallthru
          _
        // Predicated region
        $region53: #{tpu_custom_call.1} parent=31 // pred_check
          %p416 = pneg %p112
        $region54: #{tpu_custom_call.1} parent=31 // pred_check_branch
          %418 = sbr.rel (%p416) target = $region56
        $region55: #{tpu_custom_call.1} parent=31 // pred_region
          %s420 = ssub.s32 16, 16
          %421 = vsyncadd [#allocation5], %s420
          %s423 = sshll.u32 [#allocation9], 4
          %s424 = int_to_ptr.vmem [resolvable:$true] %s423
          %426 = dma.vmem_to_hbm [thread:$0]  %s424, 16, %s3, [#allocation5]
        $region56: #{tpu_custom_call.1} parent=31 // pred_fallthru
          _
        // Predicated region
        $region57: #{tpu_custom_call.1} parent=31 // pred_check
          %p427 = pneg %p112
        $region58: #{tpu_custom_call.1} parent=31 // pred_check_branch
          %429 = sbr.rel (%p427) target = $region60
        $region59: #{tpu_custom_call.1} parent=31 // pred_region
          %430 = dma.done [#allocation5], 16
        $region60: #{tpu_custom_call.1} parent=31 // pred_fallthru
          _
      $region32: #{tpu_custom_call.1} parent=5 // pred_fallthru
        _
      %p431 = scmp.le.s32.totalorder 2, %s16
      // Predicated region
      $region61: #{tpu_custom_call.1} parent=5 // pred_check
        %p432 = pneg %p431
      $region62: #{tpu_custom_call.1} parent=5 // pred_check_branch
        %434 = sbr.rel (%p432) target = $region64
      $region63: #{tpu_custom_call.1} parent=5 // pred_region
        %s435 = ssub.s32 %s16, 2
      $region64: #{tpu_custom_call.1} parent=5 // pred_fallthru
        _
    $region6: #{tpu_custom_call.1} parent=1 // loop_footer
      %s20 = sadd.s32 1, %s16
    $region7: #{tpu_custom_call.1} parent=1 // loop_footer_branch
      %15 = sbr.rel target = $region3
    $region8: #{tpu_custom_call.1} parent=1 // loop_exit
      _
    %436 = vsyncpa [#allocation4], 1
    %s437 = scalar_lea.sflag [#allocation4], 1
    %438 = vsyncpa %s437, 1
    %439 = vsyncpa [#allocation7], 1
    %s440 = scalar_lea.sflag [#allocation7], 1
    %441 = vsyncpa %s440, 1
    %442 = vsyncpa [#allocation5], 1
    %s443 = scalar_lea.sflag [#allocation5], 1
    %444 = vsyncpa %s443, 1

</llo_original>
